<compile_context>
chip_gen: v6e
topology: v6e:2x2x1
jax: 0.10.0
libtpu: 0.0.40
codegen_flags: <defaults>
</compile_context>

<pallas_src>
import functools

import jax
import jax.numpy as jnp
from jax.experimental import pallas as pl
from jax.experimental.pallas import tpu as pltpu

EPS = 1e-5


def _conv_stats_kernel(t_ref, w_ref, y_ref, stats_ref, *, bt, cout):
    """One grid step: conv for `bt` samples as a single full-K matmul each,
    emitting the bf16 conv tile plus per-channel sum / sum-of-squares partials.

    t_ref:     (bt, 9*Cin, MT) bf16 pre-shifted im2col taps (K = tap*Cin + cin)
    w_ref:     (Cout, 9*Cin)   bf16 tap-major weights
    y_ref:     (bt, Cout, MT)  bf16 conv intermediate (lane-dense spatial axis)
    stats_ref: (1, 1, Cout, 2) f32  [sum, sum-of-squares] partials
    """
    w = w_ref[...]                                              # (Cout, K) bf16
    s = jnp.zeros((cout, 1), dtype=jnp.float32)
    q = jnp.zeros((cout, 1), dtype=jnp.float32)
    for b in range(bt):                                         # static, small
        y = jnp.dot(w, t_ref[b], preferred_element_type=jnp.float32)  # (Cout, MT)
        y_ref[b] = y.astype(y_ref.dtype)
        s = s + jnp.sum(y, axis=1, keepdims=True)
        q = q + jnp.sum(y * y, axis=1, keepdims=True)
    stats_ref[0, 0] = jnp.concatenate([s, q], axis=1)           # (Cout, 2)


def _norm_kernel(y_ref, ss_ref, o_ref):
    """Pure epilogue: bf16 conv tile -> f32 FMA(scale, shift) -> ReLU -> store."""
    y = y_ref[...].astype(jnp.float32)                          # (BT, Cout, MT)
    scale = ss_ref[:, 0:1][None, :, :]                          # (1, Cout, 1)
    shift = ss_ref[:, 1:2][None, :, :]                          # (1, Cout, 1)
    o_ref[...] = jnp.maximum(y * scale + shift, 0.0)


def _im2col_taps(x_nchw, ho, wo):
    """k=3 s=2 p=1 pre-shifted tap planes: (N, 9*Cin, Ho*Wo) bf16,
    K index = (kh*3 + kw)*Cin + cin."""
    n, cin, h, w = x_nchw.shape
    xp = jnp.pad(x_nchw, ((0, 0), (0, 0), (1, 1), (1, 1)))      # (N, Cin, H+2, W+2)
    planes = [xp[:, :, kh:kh + 2 * ho:2, kw:kw + 2 * wo:2]      # (N, Cin, Ho, Wo)
              for kh in range(3) for kw in range(3)]
    t = jnp.stack(planes, axis=1)                               # (N, 9, Cin, Ho, Wo)
    return t.reshape(n, 9 * cin, ho * wo).astype(jnp.bfloat16)


def encoder_block_forward(x_nchw, conv_w, conv_b, bn_gamma, bn_beta, *, eps=EPS):
    """x_nchw: (N, Cin, H, W); conv_w: (Cout, Cin, 3, 3); conv_b/bn_*: (Cout,).
    Returns (N, Cout, Ho, Wo) -- conv(k3,s2,p1) -> BN(training stats) -> ReLU."""
    del conv_b  # cancels exactly under training-mode BatchNorm (mean subtraction)
    n, cin, h, w = x_nchw.shape
    cout = conv_w.shape[0]
    ho = (h + 1) // 2
    wo = (w + 1) // 2
    m = ho * wo
    k = 9 * cin

    taps = _im2col_taps(x_nchw, ho, wo)                              # (N, K, M) bf16
    w2 = jnp.transpose(conv_w, (0, 2, 3, 1)).reshape(cout, k)        # tap-major
    w2 = w2.astype(jnp.bfloat16)

    # Spatial (lane) tile: full M for small shapes, <=2048-lane chunks otherwise.
    mt = m
    if m > 2048:
        for cand in (2048, 1024, 512, 256, 128):
            if m % cand == 0:
                mt = cand
                break

    # Samples per grid step: amortize per-step overhead, bound the VMEM block
    # size conservatively (v7x has only 64 MiB physical VMEM).
    per_sample_bytes = (k * mt + cout * mt) * 2                      # bf16 blocks
    budget = 4 * 1024 * 1024
    bt = 1
    for cand in range(1, n + 1):
        if n % cand == 0 and cand * per_sample_bytes <= budget:
            bt = cand

    grid = (n // bt, m // mt)
    cparams = pltpu.CompilerParams(
        dimension_semantics=("parallel", "parallel"),
        vmem_limit_bytes=32 * 1024 * 1024,
    )

    taps_spec = pl.BlockSpec((bt, k, mt), lambda i, j: (i, 0, j))
    w_spec = pl.BlockSpec((cout, k), lambda i, j: (0, 0))
    y_spec = pl.BlockSpec((bt, cout, mt), lambda i, j: (i, 0, j))
    stats_spec = pl.BlockSpec((1, 1, cout, 2), lambda i, j: (i, j, 0, 0))
    ss_spec = pl.BlockSpec((cout, 2), lambda i, j: (0, 0))

    # Pass 1: conv (bf16 intermediate) + per-step sum / sum-of-squares partials.
    conv_y, stats = pl.pallas_call(
        functools.partial(_conv_stats_kernel, bt=bt, cout=cout),
        out_shape=(jax.ShapeDtypeStruct((n, cout, m), jnp.bfloat16),
                   jax.ShapeDtypeStruct((n // bt, m // mt, cout, 2), jnp.float32)),
        grid=grid,
        in_specs=[taps_spec, w_spec],
        out_specs=(y_spec, stats_spec),
        compiler_params=cparams,
    )(taps, w2)

    # Tiny per-channel BN folding math (f32, in the wrapper).
    cnt = n * m
    sums = jnp.sum(stats, axis=(0, 1))                               # (Cout, 2)
    mean = sums[:, 0] / cnt
    ex2 = sums[:, 1] / cnt
    var = jnp.maximum(ex2 - mean * mean, 0.0)    # biased variance (training mode)
    scale = bn_gamma.astype(jnp.float32) * jax.lax.rsqrt(var + eps)
    shift = bn_beta.astype(jnp.float32) - mean * scale
    scale_shift = jnp.stack([scale, shift], axis=1)                  # (Cout, 2) f32

    # Pass 2: load bf16 conv, folded BN affine + ReLU, lane-dense store.
    out_flat = pl.pallas_call(
        _norm_kernel,
        out_shape=jax.ShapeDtypeStruct((n, cout, m), jnp.float32),
        grid=grid,
        in_specs=[y_spec, ss_spec],
        out_specs=y_spec,
        compiler_params=cparams,
    )(conv_y, scale_shift)

    # (N, Cout, Ho*Wo) -> (N, Cout, Ho, Wo): contiguous minor dims, free reshape.
    return out_flat.reshape(n, cout, ho, wo)


def _reference(x, w, b, gamma, beta, eps=EPS):
    y = jax.lax.conv_general_dilated(
        x, w, window_strides=(2, 2), padding=((1, 1), (1, 1)),
        dimension_numbers=("NCHW", "OIHW", "NCHW"),
        precision=jax.lax.Precision.HIGHEST)
    y = y + b[None, :, None, None]
    mean = jnp.mean(y, axis=(0, 2, 3), keepdims=True)
    var = jnp.mean((y - mean) ** 2, axis=(0, 2, 3), keepdims=True)
    y = (y - mean) * jax.lax.rsqrt(var + eps)
    y = y * gamma[None, :, None, None] + beta[None, :, None, None]
    return jnp.maximum(y, 0.0)


if __name__ == "__main__":
    key = jax.random.PRNGKey(0)
    k_x, k_w, k_b = jax.random.split(key, 3)

    N, CIN, H, W = 2, 4, 16, 16
    COUT = 8

    x = jax.random.normal(k_x, (N, CIN, H, W), dtype=jnp.float32)
    conv_w = 0.1 * jax.random.normal(k_w, (COUT, CIN, 3, 3), dtype=jnp.float32)
    conv_b = 0.1 * jax.random.normal(k_b, (COUT,), dtype=jnp.float32)
    bn_gamma = jnp.ones((COUT,), dtype=jnp.float32)   # BatchNorm2d default affine init
    bn_beta = jnp.zeros((COUT,), dtype=jnp.float32)

    out = encoder_block_forward(x, conv_w, conv_b, bn_gamma, bn_beta)
    jax.block_until_ready(out)

    assert out.shape == (N, COUT, H // 2, W // 2), out.shape
    assert bool(jnp.all(out >= 0.0)), "ReLU output must be non-negative"

    ref = _reference(x, conv_w, conv_b, bn_gamma, bn_beta)
    max_err = float(jnp.max(jnp.abs(out - ref)))
    assert bool(jnp.allclose(out, ref, atol=5e-2, rtol=5e-2)), max_err

    print("KERNEL_OK")
</pallas_src>

<mosaic_0001>
module attributes {stable_mosaic.version = 11 : i64} {
  func.func @_conv_stats_kernel(%arg0: i32, %arg1: i32, %arg2: memref<2x36x64xbf16, #tpu.memory_space<vmem>>, %arg3: memref<8x36xbf16, #tpu.memory_space<vmem>>, %arg4: memref<2x8x64xbf16, #tpu.memory_space<vmem>>, %arg5: memref<1x1x8x2xf32, #tpu.memory_space<vmem>>) attributes {dimension_semantics = [#tpu.dimension_semantics<parallel>, #tpu.dimension_semantics<parallel>], iteration_bounds = array<i64: 1, 1>, scalar_prefetch = 0 : i64, scratch_operands = 0 : i64, tpu.core_type = #tpu.core_type<tc>, window_params = [{transform_indices = @transform_0, window_bounds = array<i64: 2, 36, 64>}, {pipeline_mode = #tpu.pipeline_mode<synchronous>, transform_indices = @transform_1, window_bounds = array<i64: 8, 36>}, {transform_indices = @transform_2, window_bounds = array<i64: 2, 8, 64>}, {transform_indices = @transform_3, window_bounds = array<i64: 1, 1, 8, 2>}]} {
    %c0 = arith.constant 0 : index
    %c0_0 = arith.constant 0 : index
    %0 = vector.load %arg3[%c0, %c0_0] : memref<8x36xbf16, #tpu.memory_space<vmem>>, vector<8x36xbf16>
    %cst = arith.constant 0.000000e+00 : f32
    %1 = vector.broadcast %cst : f32 to vector<8x1xf32>
    %cst_1 = arith.constant 0.000000e+00 : f32
    %2 = vector.broadcast %cst_1 : f32 to vector<8x1xf32>
    %c0_2 = arith.constant 0 : index
    %c0_3 = arith.constant 0 : index
    %c0_4 = arith.constant 0 : index
    %3 = vector.load %arg2[%c0_2, %c0_3, %c0_4] : memref<2x36x64xbf16, #tpu.memory_space<vmem>>, vector<1x36x64xbf16>
    %4 = vector.shape_cast %3 : vector<1x36x64xbf16> to vector<36x64xbf16>
    %cst_5 = arith.constant dense<0.000000e+00> : vector<8x64xf32>
    %5 = tpu.matmul %0, %4, %cst_5 {dimension_numbers = #tpu.dot_dimension_numbers<[1], [0], [0], [1], [0, 0, 1, 1], [], []>} : vector<8x36xbf16>, vector<36x64xbf16>, vector<8x64xf32> -> vector<8x64xf32>
    %6 = arith.truncf %5 : vector<8x64xf32> to vector<8x64xbf16>
    %c0_6 = arith.constant 0 : index
    %c0_7 = arith.constant 0 : index
    %c0_8 = arith.constant 0 : index
    %7 = vector.load %arg4[%c0_6, %c0_7, %c0_8] : memref<2x8x64xbf16, #tpu.memory_space<vmem>>, vector<1x8x64xbf16>
    %8 = vector.shape_cast %7 : vector<1x8x64xbf16> to vector<8x64xbf16>
    %9 = vector.shape_cast %6 : vector<8x64xbf16> to vector<1x8x64xbf16>
    tpu.vector_store %arg4[%c0_6, %c0_7, %c0_8], %9 {strides = array<i32>} : memref<2x8x64xbf16, #tpu.memory_space<vmem>>, vector<1x8x64xbf16>,
    %cst_9 = arith.constant dense<0.000000e+00> : vector<8xf32>
    %10 = vector.multi_reduction <add>, %5, %cst_9 [1] : vector<8x64xf32> to vector<8xf32>
    %11 = vector.shape_cast %10 : vector<8xf32> to vector<8x1xf32>
    %12 = arith.addf %1, %11 : vector<8x1xf32>
    %13 = arith.mulf %5, %5 : vector<8x64xf32>
    %cst_10 = arith.constant dense<0.000000e+00> : vector<8xf32>
    %14 = vector.multi_reduction <add>, %13, %cst_10 [1] : vector<8x64xf32> to vector<8xf32>
    %15 = vector.shape_cast %14 : vector<8xf32> to vector<8x1xf32>
    %16 = arith.addf %2, %15 : vector<8x1xf32>
    %c1 = arith.constant 1 : index
    %c0_11 = arith.constant 0 : index
    %c0_12 = arith.constant 0 : index
    %17 = vector.load %arg2[%c1, %c0_11, %c0_12] : memref<2x36x64xbf16, #tpu.memory_space<vmem>>, vector<1x36x64xbf16>
    %18 = vector.shape_cast %17 : vector<1x36x64xbf16> to vector<36x64xbf16>
    %cst_13 = arith.constant dense<0.000000e+00> : vector<8x64xf32>
    %19 = tpu.matmul %0, %18, %cst_13 {dimension_numbers = #tpu.dot_dimension_numbers<[1], [0], [0], [1], [0, 0, 1, 1], [], []>} : vector<8x36xbf16>, vector<36x64xbf16>, vector<8x64xf32> -> vector<8x64xf32>
    %20 = arith.truncf %19 : vector<8x64xf32> to vector<8x64xbf16>
    %c1_14 = arith.constant 1 : index
    %c0_15 = arith.constant 0 : index
    %c0_16 = arith.constant 0 : index
    %21 = vector.load %arg4[%c1_14, %c0_15, %c0_16] : memref<2x8x64xbf16, #tpu.memory_space<vmem>>, vector<1x8x64xbf16>
    %22 = vector.shape_cast %21 : vector<1x8x64xbf16> to vector<8x64xbf16>
    %23 = vector.shape_cast %20 : vector<8x64xbf16> to vector<1x8x64xbf16>
    tpu.vector_store %arg4[%c1_14, %c0_15, %c0_16], %23 {strides = array<i32>} : memref<2x8x64xbf16, #tpu.memory_space<vmem>>, vector<1x8x64xbf16>,
    %cst_17 = arith.constant dense<0.000000e+00> : vector<8xf32>
    %24 = vector.multi_reduction <add>, %19, %cst_17 [1] : vector<8x64xf32> to vector<8xf32>
    %25 = vector.shape_cast %24 : vector<8xf32> to vector<8x1xf32>
    %26 = arith.addf %12, %25 : vector<8x1xf32>
    %27 = arith.mulf %19, %19 : vector<8x64xf32>
    %cst_18 = arith.constant dense<0.000000e+00> : vector<8xf32>
    %28 = vector.multi_reduction <add>, %27, %cst_18 [1] : vector<8x64xf32> to vector<8xf32>
    %29 = vector.shape_cast %28 : vector<8xf32> to vector<8x1xf32>
    %30 = arith.addf %16, %29 : vector<8x1xf32>
    %31 = tpu.concatenate %26, %30 in 1 : vector<8x1xf32>, vector<8x1xf32> -> vector<8x2xf32>
    %c0_19 = arith.constant 0 : index
    %c0_20 = arith.constant 0 : index
    %c0_21 = arith.constant 0 : index
    %c0_22 = arith.constant 0 : index
    %32 = vector.load %arg5[%c0_19, %c0_20, %c0_21, %c0_22] : memref<1x1x8x2xf32, #tpu.memory_space<vmem>>, vector<1x1x8x2xf32>
    %33 = vector.shape_cast %32 : vector<1x1x8x2xf32> to vector<8x2xf32>
    %34 = vector.shape_cast %31 : vector<8x2xf32> to vector<1x1x8x2xf32>
    tpu.vector_store %arg5[%c0_19, %c0_20, %c0_21, %c0_22], %34 {strides = array<i32>} : memref<1x1x8x2xf32, #tpu.memory_space<vmem>>, vector<1x1x8x2xf32>,
    return
  }
  func.func @transform_0(%arg0: i32, %arg1: i32) -> (i32, i32, i32) {
    %c0_i32 = arith.constant 0 : i32
    %c0_i32_0 = arith.constant 0 : i32
    return %arg0, %c0_i32, %arg1 : i32, i32, i32
  }
  func.func @transform_1(%arg0: i32, %arg1: i32) -> (i32, i32) {
    %c0_i32 = arith.constant 0 : i32
    %c0_i32_0 = arith.constant 0 : i32
    %c0_i32_1 = arith.constant 0 : i32
    return %c0_i32, %c0_i32_0 : i32, i32
  }
  func.func @transform_2(%arg0: i32, %arg1: i32) -> (i32, i32, i32) {
    %c0_i32 = arith.constant 0 : i32
    %c0_i32_0 = arith.constant 0 : i32
    return %arg0, %c0_i32, %arg1 : i32, i32, i32
  }
  func.func @transform_3(%arg0: i32, %arg1: i32) -> (i32, i32, i32, i32) {
    %c0_i32 = arith.constant 0 : i32
    %c0_i32_0 = arith.constant 0 : i32
    %c0_i32_1 = arith.constant 0 : i32
    return %arg0, %arg1, %c0_i32, %c0_i32_0 : i32, i32, i32, i32
  }
}

</mosaic_0001>

<llo_original>
// kernel: tpu_custom_call.1
$region0: #{tpu_custom_call.1}
  #allocation0 [shape = 'u32[]', space=smem, size = 0x4, offset = 0x4, fixed_abs, tag = 'smem constant byte address 0x4 - core index']
  #allocation1 [shape = 'u32[144,128]{1,0:T(1,128)}', space=vmem, size = 0x12000, scoped, tag = 'internal scratch']
  %s0 = inlined_call_operand.vmem [shape: bf16[2,36,64], index: 0, kind: input, shape index: {}]
  %s1 = inlined_call_operand.vmem [shape: bf16[8,36], index: 1, kind: input, shape index: {}]
  %s2 = inlined_call_operand.hbm [shape: bf16[2,8,64], index: 2, kind: output, shape index: {0}]
  %s3 = inlined_call_operand.vmem [shape: f32[1,1,8,2], index: 3, kind: output, shape index: {1}]
  %4 = xla_tuple %s2, %s3
  %s5 = sld [smem:[#allocation0]]
  $region26: #{tpu_custom_call.1} parent=0
    _
  %s7 = ssub.s32 1, %s5
  %s8 = scalar_select 0, %s7, %s5
  $region1: #{tpu_custom_call.1} parent=0
    #allocation2 [shape = 'u8[4096]{0}', space=vmem, size = 0x1000, scoped, tag = 'output window, operand 0, single buffered']
    #allocation3 [shape = 's32[1]{0}', space=sflag, size = 0x4, scoped, tag = 'scoped memory for tpu_custom_call.1']
    %9 = vsyncpa [#allocation3], 0
    // Predicated region
    $region2: #{tpu_custom_call.1} parent=1 // pred_check
      _
    $region3: #{tpu_custom_call.1} parent=1 // pred_check_branch
      %11 = sbr.rel (0) target = $region5
    $region4: #{tpu_custom_call.1} parent=1 // pred_region
      _
    $region5: #{tpu_custom_call.1} parent=1 // pred_fallthru
      _
    // Predicated region
    $region6: #{tpu_custom_call.1} parent=1 // pred_check
      _
    $region7: #{tpu_custom_call.1} parent=1 // pred_check_branch
      %13 = sbr.rel (0) target = $region9
    $region8: #{tpu_custom_call.1} parent=1 // pred_region
      _
    $region9: #{tpu_custom_call.1} parent=1 // pred_fallthru
      _
    %v15 = vld [vmem:[%s1] sm:$0xf]
    %v16 = vld [vmem:[%s0] sm:$0xf]
    %v17 = vld [vmem:[%s0 + $0x4] sm:$0xf]
    %v18 = vld [vmem:[%s0 + $0x8] sm:$0xf]
    %v19 = vld [vmem:[%s0 + $0xc] sm:$0xf]
    %v20 = vld [vmem:[%s0 + $0x10] sm:$0x3]
    %v26 = vunpack.c.l.b16 %v16
    %v27 = vunpack.c.l.b16 %v17
    %v28 = vunpack.c.l.b16 %v18
    %v29 = vunpack.c.l.b16 %v19
    %v30 = vunpack.c.l.b16 %v20
    %v31 = vpack.c.b16 %v27, %v26
    %v32 = vpack.c.b16 %v29, %v28
    %v33 = vpack.c.b16 %v30, %v30
    %vm36 = vcmask 293888
    %v38 = vsel %vm36, %v15, 0
    %vm40 = vcmask 1041408
    %v42 = vsel %vm40, %v33, 0
    %44 = vmatprep.subr.bf16.mxu0 0
    %45 = vmatpush1.bf16.msra.mxu0 0
    %46 = vmatprep.subr.bf16.mxu0 0
    %47 = vmatpush1.bf16.msra.mxu0 0
    %48 = vmatprep.subr.bf16.mxu0 0
    %49 = vmatpush1.bf16.msra.mxu0 0
    %50 = vmatprep.subr.bf16.mxu0 0
    %51 = vmatpush1.bf16.msra.mxu0 0
    %52 = vmatprep.subr.bf16.mxu0 0
    %53 = vmatpush1.bf16.msra.mxu0 0
    %54 = vmatprep.subr.bf16.mxu0 0
    %55 = vmatpush1.bf16.msra.mxu0 %v42
    %56 = vmatprep.subr.bf16.mxu0 0
    %57 = vmatpush1.bf16.msra.mxu0 %v32
    %58 = vmatprep.subr.bf16.mxu0 0
    %59 = vmatpush1.bf16.msra.mxu0 %v31
    %60 = vmatprep.subr.bf16.mxu0 0
    %61 = vmatpush2.bf16.msra.mxu0 0
    %62 = vmatprep.subr.bf16.mxu0 0
    %63 = vmatpush2.bf16.msra.mxu0 0
    %64 = vmatprep.subr.bf16.mxu0 0
    %65 = vmatpush2.bf16.msra.mxu0 0
    %66 = vmatprep.subr.bf16.mxu0 0
    %67 = vmatpush2.bf16.msra.mxu0 0
    %68 = vmatprep.subr.bf16.mxu0 0
    %69 = vmatpush2.bf16.msra.mxu0 0
    %70 = vmatprep.subr.bf16.mxu0 0
    %71 = vmatpush2.bf16.msra.mxu0 0
    %72 = vmatprep.subr.bf16.mxu0 0
    %73 = vmatpush2.bf16.msra.mxu0 0
    %74 = vmatprep.subr.bf16.mxu0 0
    %75 = vmatpush2.bf16.msra.mxu0 0
    %76 = vmatprep.mubr.bf16.mxu0 0
    %77 = vmatmul.mubr.bf16.gmra.mxu0 %v38
    %v78 = vpop.f32.mrf.mxu0
    %v79 = vadd.f32 0.0, %v78
    %v80 = vpop.f32.mrf.mxu0
    %v81 = vpop.f32.mrf.mxu0
    %v82 = vpop.f32.mrf.mxu0
    %83 = vdwg.mxu0
    %v84 = vpack.c.bf16 %v79, %v79
    %vm85 = vcmask 519168
    %86 = vst.msk [vmem:[#allocation2] sm:$0xf] %vm85, %v84
    %vm87 = vcmask 523264
    %v88 = vsel %vm87, %v79, 0.0
    %89 = vadd.xlane.f32.xlu0 %v88
    %v90 = vpop.xlane.xlu0 %89
    %v91 = vadd.f32 %v90, 0.0
    %v92 = vmul.f32 %v79, %v79
    %v93 = vsel %vm87, %v92, 0.0
    %94 = vadd.xlane.f32.xlu0 %v93
    %v95 = vpop.xlane.xlu0 %94
    %v96 = vadd.f32 %v95, 0.0
    %s97 = scalar_lea.vmem %s0, 20
    %v98 = vld [vmem:[%s97] sm:$0xf]
    %v99 = vld [vmem:[%s97 + $0x4] sm:$0xf]
    %v100 = vld [vmem:[%s97 + $0x8] sm:$0xf]
    %v101 = vld [vmem:[%s97 + $0xc] sm:$0xf]
    %v102 = vld [vmem:[%s97 + $0x10] sm:$0x3]
    %v108 = vunpack.c.l.b16 %v98
    %v109 = vunpack.c.l.b16 %v99
    %v110 = vunpack.c.l.b16 %v100
    %v111 = vunpack.c.l.b16 %v101
    %v112 = vunpack.c.l.b16 %v102
    %v113 = vpack.c.b16 %v109, %v108
    %v114 = vpack.c.b16 %v111, %v110
    %v115 = vpack.c.b16 %v112, %v112
    %v119 = vsel %vm40, %v115, 0
    %121 = vmatprep.subr.bf16.mxu0 0
    %122 = vmatpush1.bf16.msra.mxu0 0
    %123 = vmatprep.subr.bf16.mxu0 0
    %124 = vmatpush1.bf16.msra.mxu0 0
    %125 = vmatprep.subr.bf16.mxu0 0
    %126 = vmatpush1.bf16.msra.mxu0 0
    %127 = vmatprep.subr.bf16.mxu0 0
    %128 = vmatpush1.bf16.msra.mxu0 0
    %129 = vmatprep.subr.bf16.mxu0 0
    %130 = vmatpush1.bf16.msra.mxu0 0
    %131 = vmatprep.subr.bf16.mxu0 0
    %132 = vmatpush1.bf16.msra.mxu0 %v119
    %133 = vmatprep.subr.bf16.mxu0 0
    %134 = vmatpush1.bf16.msra.mxu0 %v114
    %135 = vmatprep.subr.bf16.mxu0 0
    %136 = vmatpush1.bf16.msra.mxu0 %v113
    %137 = vmatprep.subr.bf16.mxu0 0
    %138 = vmatpush2.bf16.msra.mxu0 0
    %139 = vmatprep.subr.bf16.mxu0 0
    %140 = vmatpush2.bf16.msra.mxu0 0
    %141 = vmatprep.subr.bf16.mxu0 0
    %142 = vmatpush2.bf16.msra.mxu0 0
    %143 = vmatprep.subr.bf16.mxu0 0
    %144 = vmatpush2.bf16.msra.mxu0 0
    %145 = vmatprep.subr.bf16.mxu0 0
    %146 = vmatpush2.bf16.msra.mxu0 0
    %147 = vmatprep.subr.bf16.mxu0 0
    %148 = vmatpush2.bf16.msra.mxu0 0
    %149 = vmatprep.subr.bf16.mxu0 0
    %150 = vmatpush2.bf16.msra.mxu0 0
    %151 = vmatprep.subr.bf16.mxu0 0
    %152 = vmatpush2.bf16.msra.mxu0 0
    %153 = vmatprep.mubr.bf16.mxu0 0
    %154 = vmatmul.mubr.bf16.gmra.mxu0 %v38
    %v155 = vpop.f32.mrf.mxu0
    %v156 = vadd.f32 0.0, %v155
    %v157 = vpop.f32.mrf.mxu0
    %v158 = vpop.f32.mrf.mxu0
    %v159 = vpop.f32.mrf.mxu0
    %160 = vdwg.mxu0
    %v161 = vpack.c.bf16 %v156, %v156
    %s162 = scalar_lea.vmem [#allocation2], 4
    %163 = vst.msk [vmem:[%s162] sm:$0xf] %vm85, %v161
    %v164 = vsel %vm87, %v156, 0.0
    %165 = vadd.xlane.f32.xlu0 %v164
    %v166 = vpop.xlane.xlu0 %165
    %v167 = vadd.f32 %v91, %v166
    %v168 = vmul.f32 %v156, %v156
    %v169 = vsel %vm87, %v168, 0.0
    %170 = vadd.xlane.f32.xlu0 %v169
    %v171 = vpop.xlane.xlu0 %170
    %v172 = vadd.f32 %v96, %v171
    %vm173 = vcmask 7168
    %v174 = vsel %vm173, %v167, %v172
    %vm175 = vcmask 15360
    %176 = vst.msk [vmem:[%s3] sm:$0xff] %vm175, %v174
    // Predicated region
    $region10: #{tpu_custom_call.1} parent=1 // pred_check
      _
    $region11: #{tpu_custom_call.1} parent=1 // pred_check_branch
      %178 = sbr.rel (0) target = $region13
    $region12: #{tpu_custom_call.1} parent=1 // pred_region
      %s180 = ssub.s32 128, 128
      %181 = vsyncadd [#allocation3], %s180
      %s182 = sshll.u32 [#allocation2], 4
      %s183 = int_to_ptr.vmem [resolvable:$true] %s182
      %188 = dma.vmem_to_hbm [thread:$0]  %s183, 128, %s2, [#allocation3], 64, 64, 4
    $region13: #{tpu_custom_call.1} parent=1 // pred_fallthru
      _
    // Predicated region
    $region14: #{tpu_custom_call.1} parent=1 // pred_check
      _
    $region15: #{tpu_custom_call.1} parent=1 // pred_check_branch
      %190 = sbr.rel (0) target = $region17
    $region16: #{tpu_custom_call.1} parent=1 // pred_region
      _
    $region17: #{tpu_custom_call.1} parent=1 // pred_fallthru
      _
    // Predicated region
    $region18: #{tpu_custom_call.1} parent=1 // pred_check
      _
    $region19: #{tpu_custom_call.1} parent=1 // pred_check_branch
      %192 = sbr.rel (0) target = $region21
    $region20: #{tpu_custom_call.1} parent=1 // pred_region
      %193 = dma.done [#allocation3], 128
    $region21: #{tpu_custom_call.1} parent=1 // pred_fallthru
      _
    // Predicated region
    $region22: #{tpu_custom_call.1} parent=1 // pred_check
      _
    $region23: #{tpu_custom_call.1} parent=1 // pred_check_branch
      %195 = sbr.rel (0) target = $region25
    $region24: #{tpu_custom_call.1} parent=1 // pred_region
      _
    $region25: #{tpu_custom_call.1} parent=1 // pred_fallthru
      _
    %196 = vsyncpa [#allocation3], 1

</llo_original>
